<compile_context>
chip_gen: v6e
topology: v6e:2x2x1
jax: 0.10.0
libtpu: 0.0.40
codegen_flags: <defaults>
</compile_context>

<pallas_src>
import functools

import jax
import jax.numpy as jnp
from jax.experimental import pallas as pl
from jax.experimental.pallas import tpu as pltpu

LN_EPS = 1e-5          # torch.nn.LayerNorm default
LEAKY_SLOPE = 0.01     # torch.nn.LeakyReLU default
NEG = -1e30            # logit fill for padded action lanes -> exp underflows to 0
LANE = 128
SUBLANE = 8


def _round_up(x, m):
    return ((x + m - 1) // m) * m


def _leaky_relu(h):
    return jnp.where(h >= 0, h, LEAKY_SLOPE * h)


def _layernorm_padded(h, gamma, beta, n_real, n_pad):
    """LayerNorm over the first n_real lanes without a lane mask.

    Pad lanes of h are exactly 0, so c = h - mean equals -mean there and each
    pad lane contributes exactly mean^2 to sum(c*c).  gamma/beta are 0 on pad
    lanes, so the output pad lanes stay exactly 0.
    """
    inv_n = 1.0 / float(n_real)
    mean = jnp.sum(h, axis=-1, keepdims=True) * inv_n
    c = h - mean
    ssq = jnp.sum(c * c, axis=-1, keepdims=True)
    if n_pad:                                   # compile-time constant
        ssq = ssq - float(n_pad) * (mean * mean)
    return c * jax.lax.rsqrt(ssq * inv_n + LN_EPS) * gamma + beta


def actor_kernel(x_ref, w1_ref, w2_ref, w3_ref, vecs_ref, o_ref, *,
                 hidden, h_pad, a_pad, mxu_dtype):
    # Read the 7 bias/gamma/beta rows straight from the packed slab ref
    # (no full (8, VEC_W) slab load).
    b1 = vecs_ref[0:1, 0:h_pad]
    g1 = vecs_ref[1:2, 0:h_pad]
    be1 = vecs_ref[2:3, 0:h_pad]
    b2 = vecs_ref[3:4, 0:h_pad]
    g2 = vecs_ref[4:5, 0:h_pad]
    be2 = vecs_ref[5:6, 0:h_pad]
    b3 = vecs_ref[6:7, 0:a_pad]

    n_pad = h_pad - hidden

    def mm(a, w_ref):
        # Weights are stored in mxu_dtype (f32 default, bf16 optional on
        # v6e/v7x); accumulate in f32 either way.
        return jnp.dot(a.astype(mxu_dtype), w_ref[...],
                       preferred_element_type=jnp.float32)

    x = x_ref[...]

    # ---- block 1: Linear + LayerNorm + LeakyReLU ----
    h = mm(x, w1_ref) + b1
    h = _leaky_relu(_layernorm_padded(h, g1, be1, hidden, n_pad))

    # ---- block 2: Linear + LayerNorm + LeakyReLU ----
    h = mm(h, w2_ref) + b2
    h = _leaky_relu(_layernorm_padded(h, g2, be2, hidden, n_pad))

    # ---- head: Linear + Softmax (padded action lanes carry NEG f32 logits) ----
    logits = mm(h, w3_ref) + b3
    m = jnp.max(logits, axis=-1, keepdims=True)
    e = jnp.exp(logits - m)
    denom = jnp.sum(e, axis=-1, keepdims=True)
    inv = pl.reciprocal(denom, approx=True)     # EUP vrcp (free slot)
    inv = inv * (2.0 - denom * inv)             # one Newton step -> f32 accuracy
    o_ref[...] = (e * inv).astype(o_ref.dtype)


def prepare_actor_params(params, *, weights_dtype=jnp.float32):
    """Pad & pack all x-independent parameters ONCE (hoisted out of the hot path).

    Call this at init / after a parameter update, not per forward call.
    weights_dtype=jnp.bfloat16 halves weight DMA/VMEM and uses the native bf16
    MXU path on v6e/v7x (LN/softmax math stays f32 in the kernel).
    """
    S, H = params["w1"].shape
    A = params["w3"].shape[1]
    H_pad = _round_up(max(H, LANE), LANE)
    A_pad = _round_up(max(A, LANE), LANE)
    VEC_W = max(H_pad, A_pad)

    def pad2(w, r, c):
        out = jnp.zeros((r, c), weights_dtype)
        return out.at[:w.shape[0], :w.shape[1]].set(w.astype(weights_dtype))

    def row(v, fill=0.0):
        r = jnp.full((1, VEC_W), fill, jnp.float32)
        return r.at[:, :v.shape[-1]].set(v.reshape(1, -1).astype(jnp.float32))

    # One packed slab for the 7 per-layer vectors -> a single DMA.
    vecs = jnp.concatenate([
        row(params["b1"]), row(params["g1"]), row(params["be1"]),
        row(params["b2"]), row(params["g2"]), row(params["be2"]),
        row(params["b3"], fill=NEG),            # pad lanes -> -1e30 logits
        jnp.zeros((1, VEC_W), jnp.float32),     # pad to 8 sublanes
    ], axis=0)                                   # (8, VEC_W)

    return {
        "w1p": pad2(params["w1"], S, H_pad),
        "w2p": pad2(params["w2"], H_pad, H_pad),
        "w3p": pad2(params["w3"], H_pad, A_pad),
        "vecs": vecs,
        "dims": {"S": S, "H": H, "A": A,
                 "H_pad": H_pad, "A_pad": A_pad, "VEC_W": VEC_W},
        "weights_dtype": weights_dtype,
    }


def _choose_batch_tile(B, batch_tile, min_grid):
    """Balanced batch tiling: tile <= ~batch_tile rows, minimal padding waste,
    and >= min_grid grid steps when the batch allows (so the 'parallel' axis
    can shard across v7x's 2 TensorCores; no-op on v5e/v6e)."""
    B8 = _round_up(B, SUBLANE)
    n = max(pl.cdiv(B8, batch_tile), min(min_grid, B8 // SUBLANE), 1)
    TB = _round_up(pl.cdiv(B8, n), SUBLANE)
    B_pad = _round_up(B8, TB)
    return TB, B_pad


def model_actor_forward(x, prepared, *, batch_tile=512):
    """x: (B, state_size) f32. prepared: output of prepare_actor_params().
    Returns (B, action_size) action probabilities."""
    d = prepared["dims"]
    S, H, A = d["S"], d["H"], d["A"]
    H_pad, A_pad, VEC_W = d["H_pad"], d["A_pad"], d["VEC_W"]
    w_dtype = prepared["weights_dtype"]

    B = x.shape[0]
    assert x.shape[1] == S

    TB, B_pad = _choose_batch_tile(B, batch_tile, min_grid=2)
    n_grid = B_pad // TB

    x_p = x.astype(jnp.float32)
    if B_pad != B:
        x_p = jnp.zeros((B_pad, S), jnp.float32).at[:B, :].set(x_p)

    kernel = functools.partial(actor_kernel, hidden=H, h_pad=H_pad,
                               a_pad=A_pad, mxu_dtype=w_dtype)

    # Advisory cost estimate for XLA's scheduler.
    w_itemsize = jnp.dtype(w_dtype).itemsize
    w_bytes = w_itemsize * (prepared["w1p"].size + prepared["w2p"].size
                            + prepared["w3p"].size)
    flops = 2 * B_pad * (S * H_pad + H_pad * H_pad + H_pad * A_pad)
    bytes_accessed = int(4 * (x_p.size + prepared["vecs"].size + B_pad * A_pad)
                         + w_bytes)
    cost = pl.CostEstimate(flops=flops,
                           transcendentals=B_pad * (A_pad + 2),
                           bytes_accessed=bytes_accessed)

    # Only raise the scoped VMEM limit when the resident weights actually need
    # it (large H).  On v7x (64 MiB/TC) prefer bf16 weights or K-tiling instead.
    resident_bytes = w_bytes + 4 * prepared["vecs"].size
    tile_bytes = 4 * (TB * S + TB * A_pad) * 2          # double-buffered x/out
    need = 2 * resident_bytes + tile_bytes              # worst case: weights 2x buffered
    vmem_limit = None
    if need > 24 << 20:
        vmem_limit = min(int(need * 1.25), 100 << 20)

    def build(single_buffer_weights):
        # Constant-index blocks never need a second pipeline buffer.
        resident = ({"pipeline_mode": pl.Buffered(1)}
                    if single_buffer_weights else {})
        grid_spec = pltpu.PrefetchScalarGridSpec(
            num_scalar_prefetch=0,
            grid=(n_grid,),
            in_specs=[
                pl.BlockSpec((TB, S), lambda i: (i, 0)),              # x: tiled
                pl.BlockSpec((S, H_pad), lambda i: (0, 0), **resident),
                pl.BlockSpec((H_pad, H_pad), lambda i: (0, 0), **resident),
                pl.BlockSpec((H_pad, A_pad), lambda i: (0, 0), **resident),
                pl.BlockSpec((8, VEC_W), lambda i: (0, 0), **resident),
            ],
            out_specs=pl.BlockSpec((TB, A_pad), lambda i: (i, 0)),    # lane-dense
        )
        cp_kwargs = {"dimension_semantics": ("parallel",)}
        if vmem_limit is not None:
            cp_kwargs["vmem_limit_bytes"] = vmem_limit
        return pl.pallas_call(
            kernel,
            out_shape=jax.ShapeDtypeStruct((B_pad, A_pad), jnp.float32),
            grid_spec=grid_spec,
            compiler_params=pltpu.CompilerParams(**cp_kwargs),
            cost_estimate=cost,
        )

    args = (x_p, prepared["w1p"], prepared["w2p"], prepared["w3p"],
            prepared["vecs"])
    try:
        out = jax.block_until_ready(build(True)(*args))
    except Exception:
        # Fallback for Pallas versions that reject pipeline_mode=Buffered(1)
        # on pallas_call in_specs; identical semantics, default buffering.
        out = build(False)(*args)

    # TODO(synk): for large-batch HBM-bound use, pack probabilities lane-dense
    # in-kernel (A=4 << 128 lanes) instead of writing (B_pad, A_pad) and slicing.
    return out[:B, :A]


def init_params(key, state_size, action_size, hidden_size):
    """Deterministic synthetic init (PyTorch-style uniform fan-in bounds)."""
    ks = jax.random.split(key, 6)

    def lin(kw, kb, fan_in, fan_out):
        bound = 1.0 / jnp.sqrt(jnp.float32(fan_in))
        w = jax.random.uniform(kw, (fan_in, fan_out), jnp.float32, -bound, bound)
        b = jax.random.uniform(kb, (1, fan_out), jnp.float32, -bound, bound)
        return w, b

    w1, b1 = lin(ks[0], ks[1], state_size, hidden_size)
    w2, b2 = lin(ks[2], ks[3], hidden_size, hidden_size)
    w3, b3 = lin(ks[4], ks[5], hidden_size, action_size)
    return {
        "w1": w1, "b1": b1,
        "g1": jnp.ones((1, hidden_size), jnp.float32),
        "be1": jnp.zeros((1, hidden_size), jnp.float32),
        "w2": w2, "b2": b2,
        "g2": jnp.ones((1, hidden_size), jnp.float32),
        "be2": jnp.zeros((1, hidden_size), jnp.float32),
        "w3": w3, "b3": b3,
    }


def _reference(x, p):
    def ln(h, g, b):
        mu = jnp.mean(h, axis=-1, keepdims=True)
        var = jnp.mean((h - mu) * (h - mu), axis=-1, keepdims=True)
        return (h - mu) * jax.lax.rsqrt(var + LN_EPS) * g + b

    h = _leaky_relu(ln(x @ p["w1"] + p["b1"], p["g1"], p["be1"]))
    h = _leaky_relu(ln(h @ p["w2"] + p["b2"], p["g2"], p["be2"]))
    return jax.nn.softmax(h @ p["w3"] + p["b3"], axis=1)


if __name__ == "__main__":
    key = jax.random.PRNGKey(0)
    k_x, k_p = jax.random.split(key)

    batch, state_size, action_size, hidden_size = 8, 16, 4, 32
    x = jax.random.normal(k_x, (batch, state_size), jnp.float32)
    params = init_params(k_p, state_size, action_size, hidden_size)

    # Hoisted out of the hot path: pad/pack weights once, reuse every call.
    prepared = prepare_actor_params(params)

    out = jax.block_until_ready(model_actor_forward(x, prepared))

    ref = _reference(x, params)
    assert out.shape == (batch, action_size)
    assert jnp.allclose(out, ref, atol=1e-5, rtol=1e-5)
    assert jnp.allclose(jnp.sum(out, axis=1), 1.0, atol=1e-5)

    print("KERNEL_OK")
</pallas_src>

<mosaic_0001>
module attributes {stable_mosaic.version = 11 : i64} {
  func.func @actor_kernel(%arg0: i32, %arg1: memref<8x16xf32, #tpu.memory_space<vmem>>, %arg2: memref<16x128xf32, #tpu.memory_space<vmem>>, %arg3: memref<128x128xf32, #tpu.memory_space<vmem>>, %arg4: memref<128x128xf32, #tpu.memory_space<vmem>>, %arg5: memref<8x128xf32, #tpu.memory_space<vmem>>, %arg6: memref<8x128xf32, #tpu.memory_space<vmem>>) attributes {dimension_semantics = [#tpu.dimension_semantics<parallel>], iteration_bounds = array<i64: 1>, scalar_prefetch = 0 : i64, scratch_operands = 0 : i64, tpu.core_type = #tpu.core_type<tc>, window_params = [{transform_indices = @transform_0, window_bounds = array<i64: 8, 16>}, {pipeline_mode = #tpu.pipeline_mode<synchronous>, transform_indices = @transform_1, window_bounds = array<i64: 16, 128>}, {pipeline_mode = #tpu.pipeline_mode<synchronous>, transform_indices = @transform_2, window_bounds = array<i64: 128, 128>}, {pipeline_mode = #tpu.pipeline_mode<synchronous>, transform_indices = @transform_3, window_bounds = array<i64: 128, 128>}, {pipeline_mode = #tpu.pipeline_mode<synchronous>, transform_indices = @transform_4, window_bounds = array<i64: 8, 128>}, {transform_indices = @transform_5, window_bounds = array<i64: 8, 128>}]} {
    %c0 = arith.constant 0 : index
    %c0_0 = arith.constant 0 : index
    %0 = vector.load %arg5[%c0, %c0_0] : memref<8x128xf32, #tpu.memory_space<vmem>>, vector<1x128xf32>
    %c1 = arith.constant 1 : index
    %c0_1 = arith.constant 0 : index
    %1 = vector.load %arg5[%c1, %c0_1] : memref<8x128xf32, #tpu.memory_space<vmem>>, vector<1x128xf32>
    %c2 = arith.constant 2 : index
    %c0_2 = arith.constant 0 : index
    %2 = vector.load %arg5[%c2, %c0_2] : memref<8x128xf32, #tpu.memory_space<vmem>>, vector<1x128xf32>
    %c3 = arith.constant 3 : index
    %c0_3 = arith.constant 0 : index
    %3 = vector.load %arg5[%c3, %c0_3] : memref<8x128xf32, #tpu.memory_space<vmem>>, vector<1x128xf32>
    %c4 = arith.constant 4 : index
    %c0_4 = arith.constant 0 : index
    %4 = vector.load %arg5[%c4, %c0_4] : memref<8x128xf32, #tpu.memory_space<vmem>>, vector<1x128xf32>
    %c5 = arith.constant 5 : index
    %c0_5 = arith.constant 0 : index
    %5 = vector.load %arg5[%c5, %c0_5] : memref<8x128xf32, #tpu.memory_space<vmem>>, vector<1x128xf32>
    %c6 = arith.constant 6 : index
    %c0_6 = arith.constant 0 : index
    %6 = vector.load %arg5[%c6, %c0_6] : memref<8x128xf32, #tpu.memory_space<vmem>>, vector<1x128xf32>
    %c0_7 = arith.constant 0 : index
    %c0_8 = arith.constant 0 : index
    %7 = vector.load %arg1[%c0_7, %c0_8] : memref<8x16xf32, #tpu.memory_space<vmem>>, vector<8x16xf32>
    %c0_9 = arith.constant 0 : index
    %c0_10 = arith.constant 0 : index
    %8 = vector.load %arg2[%c0_9, %c0_10] : memref<16x128xf32, #tpu.memory_space<vmem>>, vector<16x128xf32>
    %cst = arith.constant dense<0.000000e+00> : vector<8x128xf32>
    %9 = tpu.matmul %7, %8, %cst {dimension_numbers = #tpu.dot_dimension_numbers<[1], [0], [0], [1], [0, 0, 1, 1], [], []>} : vector<8x16xf32>, vector<16x128xf32>, vector<8x128xf32> -> vector<8x128xf32>
    %10 = vector.broadcast %0 : vector<1x128xf32> to vector<8x128xf32>
    %11 = arith.addf %9, %10 : vector<8x128xf32>
    %cst_11 = arith.constant dense<0.000000e+00> : vector<8xf32>
    %12 = vector.multi_reduction <add>, %11, %cst_11 [1] : vector<8x128xf32> to vector<8xf32>
    %13 = vector.shape_cast %12 : vector<8xf32> to vector<8x1xf32>
    %cst_12 = arith.constant 3.125000e-02 : f32
    %14 = vector.broadcast %cst_12 : f32 to vector<8x1xf32>
    %15 = arith.mulf %13, %14 : vector<8x1xf32>
    %16 = vector.broadcast %15 : vector<8x1xf32> to vector<8x128xf32>
    %17 = arith.subf %11, %16 : vector<8x128xf32>
    %18 = arith.mulf %17, %17 : vector<8x128xf32>
    %cst_13 = arith.constant dense<0.000000e+00> : vector<8xf32>
    %19 = vector.multi_reduction <add>, %18, %cst_13 [1] : vector<8x128xf32> to vector<8xf32>
    %20 = vector.shape_cast %19 : vector<8xf32> to vector<8x1xf32>
    %21 = arith.mulf %15, %15 : vector<8x1xf32>
    %cst_14 = arith.constant 9.600000e+01 : f32
    %22 = vector.broadcast %cst_14 : f32 to vector<8x1xf32>
    %23 = arith.mulf %22, %21 : vector<8x1xf32>
    %24 = arith.subf %20, %23 : vector<8x1xf32>
    %cst_15 = arith.constant 3.125000e-02 : f32
    %25 = vector.broadcast %cst_15 : f32 to vector<8x1xf32>
    %26 = arith.mulf %24, %25 : vector<8x1xf32>
    %cst_16 = arith.constant 9.99999974E-6 : f32
    %27 = vector.broadcast %cst_16 : f32 to vector<8x1xf32>
    %28 = arith.addf %26, %27 : vector<8x1xf32>
    %29 = math.rsqrt %28 : vector<8x1xf32>
    %30 = vector.broadcast %29 : vector<8x1xf32> to vector<8x128xf32>
    %31 = arith.mulf %17, %30 : vector<8x128xf32>
    %32 = vector.broadcast %1 : vector<1x128xf32> to vector<8x128xf32>
    %33 = arith.mulf %31, %32 : vector<8x128xf32>
    %34 = vector.broadcast %2 : vector<1x128xf32> to vector<8x128xf32>
    %35 = arith.addf %33, %34 : vector<8x128xf32>
    %cst_17 = arith.constant 0.000000e+00 : f32
    %36 = vector.broadcast %cst_17 : f32 to vector<8x128xf32>
    %37 = arith.cmpf oge, %35, %36 : vector<8x128xf32>
    %cst_18 = arith.constant 0.00999999977 : f32
    %38 = vector.broadcast %cst_18 : f32 to vector<8x128xf32>
    %39 = arith.mulf %38, %35 : vector<8x128xf32>
    %40 = arith.select %37, %35, %39 : vector<8x128xi1>, vector<8x128xf32>
    %c0_19 = arith.constant 0 : index
    %c0_20 = arith.constant 0 : index
    %41 = vector.load %arg3[%c0_19, %c0_20] : memref<128x128xf32, #tpu.memory_space<vmem>>, vector<128x128xf32>
    %cst_21 = arith.constant dense<0.000000e+00> : vector<8x128xf32>
    %42 = tpu.matmul %40, %41, %cst_21 {dimension_numbers = #tpu.dot_dimension_numbers<[1], [0], [0], [1], [0, 0, 1, 1], [], []>} : vector<8x128xf32>, vector<128x128xf32>, vector<8x128xf32> -> vector<8x128xf32>
    %43 = vector.broadcast %3 : vector<1x128xf32> to vector<8x128xf32>
    %44 = arith.addf %42, %43 : vector<8x128xf32>
    %cst_22 = arith.constant dense<0.000000e+00> : vector<8xf32>
    %45 = vector.multi_reduction <add>, %44, %cst_22 [1] : vector<8x128xf32> to vector<8xf32>
    %46 = vector.shape_cast %45 : vector<8xf32> to vector<8x1xf32>
    %cst_23 = arith.constant 3.125000e-02 : f32
    %47 = vector.broadcast %cst_23 : f32 to vector<8x1xf32>
    %48 = arith.mulf %46, %47 : vector<8x1xf32>
    %49 = vector.broadcast %48 : vector<8x1xf32> to vector<8x128xf32>
    %50 = arith.subf %44, %49 : vector<8x128xf32>
    %51 = arith.mulf %50, %50 : vector<8x128xf32>
    %cst_24 = arith.constant dense<0.000000e+00> : vector<8xf32>
    %52 = vector.multi_reduction <add>, %51, %cst_24 [1] : vector<8x128xf32> to vector<8xf32>
    %53 = vector.shape_cast %52 : vector<8xf32> to vector<8x1xf32>
    %54 = arith.mulf %48, %48 : vector<8x1xf32>
    %cst_25 = arith.constant 9.600000e+01 : f32
    %55 = vector.broadcast %cst_25 : f32 to vector<8x1xf32>
    %56 = arith.mulf %55, %54 : vector<8x1xf32>
    %57 = arith.subf %53, %56 : vector<8x1xf32>
    %cst_26 = arith.constant 3.125000e-02 : f32
    %58 = vector.broadcast %cst_26 : f32 to vector<8x1xf32>
    %59 = arith.mulf %57, %58 : vector<8x1xf32>
    %cst_27 = arith.constant 9.99999974E-6 : f32
    %60 = vector.broadcast %cst_27 : f32 to vector<8x1xf32>
    %61 = arith.addf %59, %60 : vector<8x1xf32>
    %62 = math.rsqrt %61 : vector<8x1xf32>
    %63 = vector.broadcast %62 : vector<8x1xf32> to vector<8x128xf32>
    %64 = arith.mulf %50, %63 : vector<8x128xf32>
    %65 = vector.broadcast %4 : vector<1x128xf32> to vector<8x128xf32>
    %66 = arith.mulf %64, %65 : vector<8x128xf32>
    %67 = vector.broadcast %5 : vector<1x128xf32> to vector<8x128xf32>
    %68 = arith.addf %66, %67 : vector<8x128xf32>
    %cst_28 = arith.constant 0.000000e+00 : f32
    %69 = vector.broadcast %cst_28 : f32 to vector<8x128xf32>
    %70 = arith.cmpf oge, %68, %69 : vector<8x128xf32>
    %cst_29 = arith.constant 0.00999999977 : f32
    %71 = vector.broadcast %cst_29 : f32 to vector<8x128xf32>
    %72 = arith.mulf %71, %68 : vector<8x128xf32>
    %73 = arith.select %70, %68, %72 : vector<8x128xi1>, vector<8x128xf32>
    %c0_30 = arith.constant 0 : index
    %c0_31 = arith.constant 0 : index
    %74 = vector.load %arg4[%c0_30, %c0_31] : memref<128x128xf32, #tpu.memory_space<vmem>>, vector<128x128xf32>
    %cst_32 = arith.constant dense<0.000000e+00> : vector<8x128xf32>
    %75 = tpu.matmul %73, %74, %cst_32 {dimension_numbers = #tpu.dot_dimension_numbers<[1], [0], [0], [1], [0, 0, 1, 1], [], []>} : vector<8x128xf32>, vector<128x128xf32>, vector<8x128xf32> -> vector<8x128xf32>
    %76 = vector.broadcast %6 : vector<1x128xf32> to vector<8x128xf32>
    %77 = arith.addf %75, %76 : vector<8x128xf32>
    %cst_33 = arith.constant dense<0xFF800000> : vector<8xf32>
    %78 = vector.multi_reduction <maximumf>, %77, %cst_33 [1] : vector<8x128xf32> to vector<8xf32>
    %79 = vector.shape_cast %78 : vector<8xf32> to vector<8x1xf32>
    %80 = vector.broadcast %79 : vector<8x1xf32> to vector<8x128xf32>
    %81 = arith.subf %77, %80 : vector<8x128xf32>
    %82 = math.exp %81 : vector<8x128xf32>
    %cst_34 = arith.constant dense<0.000000e+00> : vector<8xf32>
    %83 = vector.multi_reduction <add>, %82, %cst_34 [1] : vector<8x128xf32> to vector<8xf32>
    %84 = vector.shape_cast %83 : vector<8xf32> to vector<8x1xf32>
    %85 = tpu.reciprocal %84 {approx = true} : vector<8x1xf32> -> vector<8x1xf32>
    %86 = arith.mulf %84, %85 : vector<8x1xf32>
    %cst_35 = arith.constant 2.000000e+00 : f32
    %87 = vector.broadcast %cst_35 : f32 to vector<8x1xf32>
    %88 = arith.subf %87, %86 : vector<8x1xf32>
    %89 = arith.mulf %85, %88 : vector<8x1xf32>
    %90 = vector.broadcast %89 : vector<8x1xf32> to vector<8x128xf32>
    %91 = arith.mulf %82, %90 : vector<8x128xf32>
    %c0_36 = arith.constant 0 : index
    %c0_37 = arith.constant 0 : index
    %92 = vector.load %arg6[%c0_36, %c0_37] : memref<8x128xf32, #tpu.memory_space<vmem>>, vector<8x128xf32>
    tpu.vector_store %arg6[%c0_36, %c0_37], %91 {strides = array<i32>} : memref<8x128xf32, #tpu.memory_space<vmem>>, vector<8x128xf32>,
    return
  }
  func.func @transform_0(%arg0: i32) -> (i32, i32) {
    %c0_i32 = arith.constant 0 : i32
    %c0_i32_0 = arith.constant 0 : i32
    return %arg0, %c0_i32 : i32, i32
  }
  func.func @transform_1(%arg0: i32) -> (i32, i32) {
    %c0_i32 = arith.constant 0 : i32
    %c0_i32_0 = arith.constant 0 : i32
    %c0_i32_1 = arith.constant 0 : i32
    return %c0_i32, %c0_i32_0 : i32, i32
  }
  func.func @transform_2(%arg0: i32) -> (i32, i32) {
    %c0_i32 = arith.constant 0 : i32
    %c0_i32_0 = arith.constant 0 : i32
    %c0_i32_1 = arith.constant 0 : i32
    return %c0_i32, %c0_i32_0 : i32, i32
  }
  func.func @transform_3(%arg0: i32) -> (i32, i32) {
    %c0_i32 = arith.constant 0 : i32
    %c0_i32_0 = arith.constant 0 : i32
    %c0_i32_1 = arith.constant 0 : i32
    return %c0_i32, %c0_i32_0 : i32, i32
  }
  func.func @transform_4(%arg0: i32) -> (i32, i32) {
    %c0_i32 = arith.constant 0 : i32
    %c0_i32_0 = arith.constant 0 : i32
    %c0_i32_1 = arith.constant 0 : i32
    return %c0_i32, %c0_i32_0 : i32, i32
  }
  func.func @transform_5(%arg0: i32) -> (i32, i32) {
    %c0_i32 = arith.constant 0 : i32
    %c0_i32_0 = arith.constant 0 : i32
    return %arg0, %c0_i32 : i32, i32
  }
}

module attributes {stable_mosaic.version = 11 : i64} {
  func.func @actor_kernel(%arg0: i32, %arg1: memref<8x16xf32, #tpu.memory_space<vmem>>, %arg2: memref<16x128xf32, #tpu.memory_space<vmem>>, %arg3: memref<128x128xf32, #tpu.memory_space<vmem>>, %arg4: memref<128x128xf32, #tpu.memory_space<vmem>>, %arg5: memref<8x128xf32, #tpu.memory_space<vmem>>, %arg6: memref<8x128xf32, #tpu.memory_space<vmem>>) attributes {dimension_semantics = [#tpu.dimension_semantics<parallel>], iteration_bounds = array<i64: 1>, scalar_prefetch = 0 : i64, scratch_operands = 0 : i64, tpu.core_type = #tpu.core_type<tc>, window_params = [{transform_indices = @transform_0, window_bounds = array<i64: 8, 16>}, {pipeline_mode = #tpu.pipeline_mode<synchronous>, transform_indices = @transform_1, window_bounds = array<i64: 16, 128>}, {pipeline_mode = #tpu.pipeline_mode<synchronous>, transform_indices = @transform_2, window_bounds = array<i64: 128, 128>}, {pipeline_mode = #tpu.pipeline_mode<synchronous>, transform_indices = @transform_3, window_bounds = array<i64: 128, 128>}, {pipeline_mode = #tpu.pipeline_mode<synchronous>, transform_indices = @transform_4, window_bounds = array<i64: 8, 128>}, {transform_indices = @transform_5, window_bounds = array<i64: 8, 128>}]} {
    %c0 = arith.constant 0 : index
    %c0_0 = arith.constant 0 : index
    %0 = vector.load %arg5[%c0, %c0_0] : memref<8x128xf32, #tpu.memory_space<vmem>>, vector<1x128xf32>
    %c1 = arith.constant 1 : index
    %c0_1 = arith.constant 0 : index
    %1 = vector.load %arg5[%c1, %c0_1] : memref<8x128xf32, #tpu.memory_space<vmem>>, vector<1x128xf32>
    %c2 = arith.constant 2 : index
    %c0_2 = arith.constant 0 : index
    %2 = vector.load %arg5[%c2, %c0_2] : memref<8x128xf32, #tpu.memory_space<vmem>>, vector<1x128xf32>
    %c3 = arith.constant 3 : index
    %c0_3 = arith.constant 0 : index
    %3 = vector.load %arg5[%c3, %c0_3] : memref<8x128xf32, #tpu.memory_space<vmem>>, vector<1x128xf32>
    %c4 = arith.constant 4 : index
    %c0_4 = arith.constant 0 : index
    %4 = vector.load %arg5[%c4, %c0_4] : memref<8x128xf32, #tpu.memory_space<vmem>>, vector<1x128xf32>
    %c5 = arith.constant 5 : index
    %c0_5 = arith.constant 0 : index
    %5 = vector.load %arg5[%c5, %c0_5] : memref<8x128xf32, #tpu.memory_space<vmem>>, vector<1x128xf32>
    %c6 = arith.constant 6 : index
    %c0_6 = arith.constant 0 : index
    %6 = vector.load %arg5[%c6, %c0_6] : memref<8x128xf32, #tpu.memory_space<vmem>>, vector<1x128xf32>
    %c0_7 = arith.constant 0 : index
    %c0_8 = arith.constant 0 : index
    %7 = vector.load %arg1[%c0_7, %c0_8] : memref<8x16xf32, #tpu.memory_space<vmem>>, vector<8x16xf32>
    %c0_9 = arith.constant 0 : index
    %c0_10 = arith.constant 0 : index
    %8 = vector.load %arg2[%c0_9, %c0_10] : memref<16x128xf32, #tpu.memory_space<vmem>>, vector<16x128xf32>
    %cst = arith.constant dense<0.000000e+00> : vector<8x128xf32>
    %9 = tpu.matmul %7, %8, %cst {dimension_numbers = #tpu.dot_dimension_numbers<[1], [0], [0], [1], [0, 0, 1, 1], [], []>} : vector<8x16xf32>, vector<16x128xf32>, vector<8x128xf32> -> vector<8x128xf32>
    %10 = vector.broadcast %0 : vector<1x128xf32> to vector<8x128xf32>
    %11 = arith.addf %9, %10 : vector<8x128xf32>
    %cst_11 = arith.constant dense<0.000000e+00> : vector<8xf32>
    %12 = vector.multi_reduction <add>, %11, %cst_11 [1] : vector<8x128xf32> to vector<8xf32>
    %13 = vector.shape_cast %12 : vector<8xf32> to vector<8x1xf32>
    %cst_12 = arith.constant 3.125000e-02 : f32
    %14 = vector.broadcast %cst_12 : f32 to vector<8x1xf32>
    %15 = arith.mulf %13, %14 : vector<8x1xf32>
    %16 = vector.broadcast %15 : vector<8x1xf32> to vector<8x128xf32>
    %17 = arith.subf %11, %16 : vector<8x128xf32>
    %18 = arith.mulf %17, %17 : vector<8x128xf32>
    %cst_13 = arith.constant dense<0.000000e+00> : vector<8xf32>
    %19 = vector.multi_reduction <add>, %18, %cst_13 [1] : vector<8x128xf32> to vector<8xf32>
    %20 = vector.shape_cast %19 : vector<8xf32> to vector<8x1xf32>
    %21 = arith.mulf %15, %15 : vector<8x1xf32>
    %cst_14 = arith.constant 9.600000e+01 : f32
    %22 = vector.broadcast %cst_14 : f32 to vector<8x1xf32>
    %23 = arith.mulf %22, %21 : vector<8x1xf32>
    %24 = arith.subf %20, %23 : vector<8x1xf32>
    %cst_15 = arith.constant 3.125000e-02 : f32
    %25 = vector.broadcast %cst_15 : f32 to vector<8x1xf32>
    %26 = arith.mulf %24, %25 : vector<8x1xf32>
    %cst_16 = arith.constant 9.99999974E-6 : f32
    %27 = vector.broadcast %cst_16 : f32 to vector<8x1xf32>
    %28 = arith.addf %26, %27 : vector<8x1xf32>
    %29 = math.rsqrt %28 : vector<8x1xf32>
    %30 = vector.broadcast %29 : vector<8x1xf32> to vector<8x128xf32>
    %31 = arith.mulf %17, %30 : vector<8x128xf32>
    %32 = vector.broadcast %1 : vector<1x128xf32> to vector<8x128xf32>
    %33 = arith.mulf %31, %32 : vector<8x128xf32>
    %34 = vector.broadcast %2 : vector<1x128xf32> to vector<8x128xf32>
    %35 = arith.addf %33, %34 : vector<8x128xf32>
    %cst_17 = arith.constant 0.000000e+00 : f32
    %36 = vector.broadcast %cst_17 : f32 to vector<8x128xf32>
    %37 = arith.cmpf oge, %35, %36 : vector<8x128xf32>
    %cst_18 = arith.constant 0.00999999977 : f32
    %38 = vector.broadcast %cst_18 : f32 to vector<8x128xf32>
    %39 = arith.mulf %38, %35 : vector<8x128xf32>
    %40 = arith.select %37, %35, %39 : vector<8x128xi1>, vector<8x128xf32>
    %c0_19 = arith.constant 0 : index
    %c0_20 = arith.constant 0 : index
    %41 = vector.load %arg3[%c0_19, %c0_20] : memref<128x128xf32, #tpu.memory_space<vmem>>, vector<128x128xf32>
    %cst_21 = arith.constant dense<0.000000e+00> : vector<8x128xf32>
    %42 = tpu.matmul %40, %41, %cst_21 {dimension_numbers = #tpu.dot_dimension_numbers<[1], [0], [0], [1], [0, 0, 1, 1], [], []>} : vector<8x128xf32>, vector<128x128xf32>, vector<8x128xf32> -> vector<8x128xf32>
    %43 = vector.broadcast %3 : vector<1x128xf32> to vector<8x128xf32>
    %44 = arith.addf %42, %43 : vector<8x128xf32>
    %cst_22 = arith.constant dense<0.000000e+00> : vector<8xf32>
    %45 = vector.multi_reduction <add>, %44, %cst_22 [1] : vector<8x128xf32> to vector<8xf32>
    %46 = vector.shape_cast %45 : vector<8xf32> to vector<8x1xf32>
    %cst_23 = arith.constant 3.125000e-02 : f32
    %47 = vector.broadcast %cst_23 : f32 to vector<8x1xf32>
    %48 = arith.mulf %46, %47 : vector<8x1xf32>
    %49 = vector.broadcast %48 : vector<8x1xf32> to vector<8x128xf32>
    %50 = arith.subf %44, %49 : vector<8x128xf32>
    %51 = arith.mulf %50, %50 : vector<8x128xf32>
    %cst_24 = arith.constant dense<0.000000e+00> : vector<8xf32>
    %52 = vector.multi_reduction <add>, %51, %cst_24 [1] : vector<8x128xf32> to vector<8xf32>
    %53 = vector.shape_cast %52 : vector<8xf32> to vector<8x1xf32>
    %54 = arith.mulf %48, %48 : vector<8x1xf32>
    %cst_25 = arith.constant 9.600000e+01 : f32
    %55 = vector.broadcast %cst_25 : f32 to vector<8x1xf32>
    %56 = arith.mulf %55, %54 : vector<8x1xf32>
    %57 = arith.subf %53, %56 : vector<8x1xf32>
    %cst_26 = arith.constant 3.125000e-02 : f32
    %58 = vector.broadcast %cst_26 : f32 to vector<8x1xf32>
    %59 = arith.mulf %57, %58 : vector<8x1xf32>
    %cst_27 = arith.constant 9.99999974E-6 : f32
    %60 = vector.broadcast %cst_27 : f32 to vector<8x1xf32>
    %61 = arith.addf %59, %60 : vector<8x1xf32>
    %62 = math.rsqrt %61 : vector<8x1xf32>
    %63 = vector.broadcast %62 : vector<8x1xf32> to vector<8x128xf32>
    %64 = arith.mulf %50, %63 : vector<8x128xf32>
    %65 = vector.broadcast %4 : vector<1x128xf32> to vector<8x128xf32>
    %66 = arith.mulf %64, %65 : vector<8x128xf32>
    %67 = vector.broadcast %5 : vector<1x128xf32> to vector<8x128xf32>
    %68 = arith.addf %66, %67 : vector<8x128xf32>
    %cst_28 = arith.constant 0.000000e+00 : f32
    %69 = vector.broadcast %cst_28 : f32 to vector<8x128xf32>
    %70 = arith.cmpf oge, %68, %69 : vector<8x128xf32>
    %cst_29 = arith.constant 0.00999999977 : f32
    %71 = vector.broadcast %cst_29 : f32 to vector<8x128xf32>
    %72 = arith.mulf %71, %68 : vector<8x128xf32>
    %73 = arith.select %70, %68, %72 : vector<8x128xi1>, vector<8x128xf32>
    %c0_30 = arith.constant 0 : index
    %c0_31 = arith.constant 0 : index
    %74 = vector.load %arg4[%c0_30, %c0_31] : memref<128x128xf32, #tpu.memory_space<vmem>>, vector<128x128xf32>
    %cst_32 = arith.constant dense<0.000000e+00> : vector<8x128xf32>
    %75 = tpu.matmul %73, %74, %cst_32 {dimension_numbers = #tpu.dot_dimension_numbers<[1], [0], [0], [1], [0, 0, 1, 1], [], []>} : vector<8x128xf32>, vector<128x128xf32>, vector<8x128xf32> -> vector<8x128xf32>
    %76 = vector.broadcast %6 : vector<1x128xf32> to vector<8x128xf32>
    %77 = arith.addf %75, %76 : vector<8x128xf32>
    %cst_33 = arith.constant dense<0xFF800000> : vector<8xf32>
    %78 = vector.multi_reduction <maximumf>, %77, %cst_33 [1] : vector<8x128xf32> to vector<8xf32>
    %79 = vector.shape_cast %78 : vector<8xf32> to vector<8x1xf32>
    %80 = vector.broadcast %79 : vector<8x1xf32> to vector<8x128xf32>
    %81 = arith.subf %77, %80 : vector<8x128xf32>
    %82 = math.exp %81 : vector<8x128xf32>
    %cst_34 = arith.constant dense<0.000000e+00> : vector<8xf32>
    %83 = vector.multi_reduction <add>, %82, %cst_34 [1] : vector<8x128xf32> to vector<8xf32>
    %84 = vector.shape_cast %83 : vector<8xf32> to vector<8x1xf32>
    %85 = tpu.reciprocal %84 {approx = true} : vector<8x1xf32> -> vector<8x1xf32>
    %86 = arith.mulf %84, %85 : vector<8x1xf32>
    %cst_35 = arith.constant 2.000000e+00 : f32
    %87 = vector.broadcast %cst_35 : f32 to vector<8x1xf32>
    %88 = arith.subf %87, %86 : vector<8x1xf32>
    %89 = arith.mulf %85, %88 : vector<8x1xf32>
    %90 = vector.broadcast %89 : vector<8x1xf32> to vector<8x128xf32>
    %91 = arith.mulf %82, %90 : vector<8x128xf32>
    %c0_36 = arith.constant 0 : index
    %c0_37 = arith.constant 0 : index
    %92 = vector.load %arg6[%c0_36, %c0_37] : memref<8x128xf32, #tpu.memory_space<vmem>>, vector<8x128xf32>
    tpu.vector_store %arg6[%c0_36, %c0_37], %91 {strides = array<i32>} : memref<8x128xf32, #tpu.memory_space<vmem>>, vector<8x128xf32>,
    return
  }
  func.func @transform_0(%arg0: i32) -> (i32, i32) {
    %c0_i32 = arith.constant 0 : i32
    %c0_i32_0 = arith.constant 0 : i32
    return %arg0, %c0_i32 : i32, i32
  }
  func.func @transform_1(%arg0: i32) -> (i32, i32) {
    %c0_i32 = arith.constant 0 : i32
    %c0_i32_0 = arith.constant 0 : i32
    %c0_i32_1 = arith.constant 0 : i32
    return %c0_i32, %c0_i32_0 : i32, i32
  }
  func.func @transform_2(%arg0: i32) -> (i32, i32) {
    %c0_i32 = arith.constant 0 : i32
    %c0_i32_0 = arith.constant 0 : i32
    %c0_i32_1 = arith.constant 0 : i32
    return %c0_i32, %c0_i32_0 : i32, i32
  }
  func.func @transform_3(%arg0: i32) -> (i32, i32) {
    %c0_i32 = arith.constant 0 : i32
    %c0_i32_0 = arith.constant 0 : i32
    %c0_i32_1 = arith.constant 0 : i32
    return %c0_i32, %c0_i32_0 : i32, i32
  }
  func.func @transform_4(%arg0: i32) -> (i32, i32) {
    %c0_i32 = arith.constant 0 : i32
    %c0_i32_0 = arith.constant 0 : i32
    %c0_i32_1 = arith.constant 0 : i32
    return %c0_i32, %c0_i32_0 : i32, i32
  }
  func.func @transform_5(%arg0: i32) -> (i32, i32) {
    %c0_i32 = arith.constant 0 : i32
    %c0_i32_0 = arith.constant 0 : i32
    return %arg0, %c0_i32 : i32, i32
  }
}

</mosaic_0001>

<llo_original>
// kernel: tpu_custom_call.1
$region0: #{tpu_custom_call.1}
  #allocation0 [shape = 'u32[]', space=smem, size = 0x4, offset = 0x4, fixed_abs, tag = 'smem constant byte address 0x4 - core index']
  #allocation1 [shape = 'u32[144,128]{1,0:T(1,128)}', space=vmem, size = 0x12000, scoped, tag = 'internal scratch']
  %s0 = inlined_call_operand.hbm [shape: f32[8,16], index: 0, kind: input, shape index: {}]
  %s1 = inlined_call_operand.hbm [shape: f32[16,128], index: 1, kind: input, shape index: {}]
  %s2 = inlined_call_operand.hbm [shape: f32[128,128], index: 2, kind: input, shape index: {}]
  %s3 = inlined_call_operand.hbm [shape: f32[128,128], index: 3, kind: input, shape index: {}]
  %s4 = inlined_call_operand.hbm [shape: f32[8,128], index: 4, kind: input, shape index: {}]
  %s5 = inlined_call_operand.hbm [shape: f32[8,128], index: 5, kind: output, shape index: {}]
  %s6 = sld [smem:[#allocation0]]
  $region50: #{tpu_custom_call.1} parent=0
    _
  %s8 = ssub.s32 1, %s6
  %s9 = scalar_select 0, %s8, %s6
  $region1: #{tpu_custom_call.1} parent=0
    #allocation2 [shape = 'u8[4096]{0}', space=vmem, size = 0x1000, scoped, tag = 'input window, operand 0, single buffered']
    #allocation3 [shape = 's32[1]{0}', space=sflag, size = 0x4, scoped, tag = 'scoped memory for tpu_custom_call.1']
    #allocation4 [shape = 's32[1]{0}', space=sflag, size = 0x4, scoped, tag = 'scoped memory for tpu_custom_call.1']
    #allocation5 [shape = 'u8[8192]{0}', space=vmem, size = 0x2000, scoped, tag = 'input window, operand 1, single buffered']
    #allocation6 [shape = 's32[1]{0}', space=sflag, size = 0x4, scoped, tag = 'scoped memory for tpu_custom_call.1']
    #allocation7 [shape = 'u8[65536]{0}', space=vmem, size = 0x10000, scoped, tag = 'input window, operand 2, single buffered']
    #allocation8 [shape = 'u8[65536]{0}', space=vmem, size = 0x10000, scoped, tag = 'input window, operand 3, single buffered']
    #allocation9 [shape = 's32[1]{0}', space=sflag, size = 0x4, scoped, tag = 'scoped memory for tpu_custom_call.1']
    #allocation10 [shape = 'u8[4096]{0}', space=vmem, size = 0x1000, scoped, tag = 'input window, operand 4, single buffered']
    #allocation11 [shape = 'u8[4096]{0}', space=vmem, size = 0x1000, scoped, tag = 'output window, operand 0, single buffered']
    %10 = vsyncpa [#allocation3], 0
    %11 = vsyncpa [#allocation6], 0
    %12 = vsyncpa [#allocation9], 0
    %13 = vsyncpa [#allocation4], 0
    // Predicated region
    $region2: #{tpu_custom_call.1} parent=1 // pred_check
      _
    $region3: #{tpu_custom_call.1} parent=1 // pred_check_branch
      %15 = sbr.rel (0) target = $region5
    $region4: #{tpu_custom_call.1} parent=1 // pred_region
      %s17 = ssub.s32 128, 128
      %18 = vsyncadd [#allocation3], %s17
      %s20 = sshll.u32 [#allocation2], 4
      %s21 = int_to_ptr.vmem [resolvable:$true] %s20
      %23 = dma.hbm_to_vmem [thread:$0]  %s0, 128, %s21, [#allocation3]
    $region5: #{tpu_custom_call.1} parent=1 // pred_fallthru
      _
    // Predicated region
    $region6: #{tpu_custom_call.1} parent=1 // pred_check
      _
    $region7: #{tpu_custom_call.1} parent=1 // pred_check_branch
      %25 = sbr.rel (0) target = $region9
    $region8: #{tpu_custom_call.1} parent=1 // pred_region
      %s27 = ssub.s32 256, 256
      %28 = vsyncadd [#allocation6], %s27
      %s29 = sshll.u32 [#allocation5], 4
      %s30 = int_to_ptr.vmem [resolvable:$true] %s29
      %35 = dma.hbm_to_vmem [thread:$0]  %s1, 256, %s30, [#allocation6], 128, 128, 8
    $region9: #{tpu_custom_call.1} parent=1 // pred_fallthru
      _
    // Predicated region
    $region10: #{tpu_custom_call.1} parent=1 // pred_check
      _
    $region11: #{tpu_custom_call.1} parent=1 // pred_check_branch
      %37 = sbr.rel (0) target = $region13
    $region12: #{tpu_custom_call.1} parent=1 // pred_region
      %s39 = ssub.s32 2048, 2048
      %40 = vsyncadd [#allocation6], %s39
      %s41 = sshll.u32 [#allocation7], 4
      %s42 = int_to_ptr.vmem [resolvable:$true] %s41
      %47 = dma.hbm_to_vmem [thread:$0]  %s2, 2048, %s42, [#allocation6], 128, 128, 8
    $region13: #{tpu_custom_call.1} parent=1 // pred_fallthru
      _
    // Predicated region
    $region14: #{tpu_custom_call.1} parent=1 // pred_check
      _
    $region15: #{tpu_custom_call.1} parent=1 // pred_check_branch
      %49 = sbr.rel (0) target = $region17
    $region16: #{tpu_custom_call.1} parent=1 // pred_region
      %s51 = ssub.s32 2048, 2048
      %52 = vsyncadd [#allocation9], %s51
      %s53 = sshll.u32 [#allocation8], 4
      %s54 = int_to_ptr.vmem [resolvable:$true] %s53
      %59 = dma.hbm_to_vmem [thread:$0]  %s3, 2048, %s54, [#allocation9], 128, 128, 8
    $region17: #{tpu_custom_call.1} parent=1 // pred_fallthru
      _
    // Predicated region
    $region18: #{tpu_custom_call.1} parent=1 // pred_check
      _
    $region19: #{tpu_custom_call.1} parent=1 // pred_check_branch
      %61 = sbr.rel (0) target = $region21
    $region20: #{tpu_custom_call.1} parent=1 // pred_region
      %s63 = ssub.s32 128, 128
      %64 = vsyncadd [#allocation9], %s63
      %s66 = sshll.u32 [#allocation10], 4
      %s67 = int_to_ptr.vmem [resolvable:$true] %s66
      %69 = dma.hbm_to_vmem [thread:$0]  %s4, 128, %s67, [#allocation9]
    $region21: #{tpu_custom_call.1} parent=1 // pred_fallthru
      _
    // Predicated region
    $region22: #{tpu_custom_call.1} parent=1 // pred_check
      _
    $region23: #{tpu_custom_call.1} parent=1 // pred_check_branch
      %71 = sbr.rel (0) target = $region25
    $region24: #{tpu_custom_call.1} parent=1 // pred_region
      %72 = dma.done [#allocation3], 128
    $region25: #{tpu_custom_call.1} parent=1 // pred_fallthru
      _
    // Predicated region
    $region26: #{tpu_custom_call.1} parent=1 // pred_check
      _
    $region27: #{tpu_custom_call.1} parent=1 // pred_check_branch
      %74 = sbr.rel (0) target = $region29
    $region28: #{tpu_custom_call.1} parent=1 // pred_region
      %75 = dma.done [#allocation6], 256
    $region29: #{tpu_custom_call.1} parent=1 // pred_fallthru
      _
    // Predicated region
    $region30: #{tpu_custom_call.1} parent=1 // pred_check
      _
    $region31: #{tpu_custom_call.1} parent=1 // pred_check_branch
      %77 = sbr.rel (0) target = $region33
    $region32: #{tpu_custom_call.1} parent=1 // pred_region
      %78 = dma.done [#allocation6], 2048
    $region33: #{tpu_custom_call.1} parent=1 // pred_fallthru
      _
    // Predicated region
    $region34: #{tpu_custom_call.1} parent=1 // pred_check
      _
    $region35: #{tpu_custom_call.1} parent=1 // pred_check_branch
      %80 = sbr.rel (0) target = $region37
    $region36: #{tpu_custom_call.1} parent=1 // pred_region
      %81 = dma.done [#allocation9], 2048
    $region37: #{tpu_custom_call.1} parent=1 // pred_fallthru
      _
    // Predicated region
    $region38: #{tpu_custom_call.1} parent=1 // pred_check
      _
    $region39: #{tpu_custom_call.1} parent=1 // pred_check_branch
      %83 = sbr.rel (0) target = $region41
    $region40: #{tpu_custom_call.1} parent=1 // pred_region
      %84 = dma.done [#allocation9], 128
    $region41: #{tpu_custom_call.1} parent=1 // pred_fallthru
      _
    %v85 = vld [vmem:[#allocation10] sm:$0x1]
    %v86 = vld [vmem:[#allocation10 + $0x1] sm:$0x1]
    %v87 = vld [vmem:[#allocation10 + $0x2] sm:$0x1]
    %v88 = vld [vmem:[#allocation10 + $0x3] sm:$0x1]
    %v89 = vld [vmem:[#allocation10 + $0x4] sm:$0x1]
    %v90 = vld [vmem:[#allocation10 + $0x5] sm:$0x1]
    %v91 = vld [vmem:[#allocation10 + $0x6] sm:$0x1]
    %v92 = vld [vmem:[#allocation2] sm:$0xff]
    %v93 = vld [vmem:[#allocation5] sm:$0xff]
    %v94 = vld [vmem:[#allocation5 + $0x8] sm:$0xff]
    %v95 = vlaneseq
    %v96 = vshrl.u32 %v95, 7
    %v97 = vsub.s32 0, %v96
    %v98 = vrot.slane %v85, %v97
    %vm99 = vcmask 130048
    %v101 = vsel %vm99, %v92, 0
    %103 = vmatprep.subr.mxu0 0.0
    %104 = vmatpush1.msra.mxu0 0.0
    %105 = vmatprep.subr.mxu0 0.0
    %106 = vmatpush1.msra.mxu0 0.0
    %107 = vmatprep.subr.mxu0 0.0
    %108 = vmatpush1.msra.mxu0 0.0
    %109 = vmatprep.subr.mxu0 0.0
    %110 = vmatpush1.msra.mxu0 0.0
    %111 = vmatprep.subr.mxu0 0.0
    %112 = vmatpush1.msra.mxu0 0.0
    %113 = vmatprep.subr.mxu0 0.0
    %114 = vmatpush1.msra.mxu0 0.0
    %115 = vmatprep.subr.mxu0 0.0
    %116 = vmatpush1.msra.mxu0 0.0
    %117 = vmatprep.subr.mxu0 0.0
    %118 = vmatpush1.msra.mxu0 0.0
    %119 = vmatprep.subr.mxu0 0.0
    %120 = vmatpush1.msra.mxu0 0.0
    %121 = vmatprep.subr.mxu0 0.0
    %122 = vmatpush1.msra.mxu0 0.0
    %123 = vmatprep.subr.mxu0 0.0
    %124 = vmatpush1.msra.mxu0 0.0
    %125 = vmatprep.subr.mxu0 0.0
    %126 = vmatpush1.msra.mxu0 0.0
    %127 = vmatprep.subr.mxu0 0.0
    %128 = vmatpush1.msra.mxu0 0.0
    %129 = vmatprep.subr.mxu0 0.0
    %130 = vmatpush1.msra.mxu0 0.0
    %131 = vmatprep.subr.mxu0 0.0
    %132 = vmatpush1.msra.mxu0 %v94
    %133 = vmatprep.subr.mxu0 0.0
    %134 = vmatpush1.msra.mxu0 %v93
    %135 = vmatprep.subr.mxu0 0.0
    %136 = vmatpush2.msra.mxu0 0.0
    %137 = vmatprep.subr.mxu0 0.0
    %138 = vmatpush2.msra.mxu0 0.0
    %139 = vmatprep.subr.mxu0 0.0
    %140 = vmatpush2.msra.mxu0 0.0
    %141 = vmatprep.subr.mxu0 0.0
    %142 = vmatpush2.msra.mxu0 0.0
    %143 = vmatprep.subr.mxu0 0.0
    %144 = vmatpush2.msra.mxu0 0.0
    %145 = vmatprep.subr.mxu0 0.0
    %146 = vmatpush2.msra.mxu0 0.0
    %147 = vmatprep.subr.mxu0 0.0
    %148 = vmatpush2.msra.mxu0 0.0
    %149 = vmatprep.subr.mxu0 0.0
    %150 = vmatpush2.msra.mxu0 0.0
    %151 = vmatprep.subr.mxu0 0.0
    %152 = vmatpush2.msra.mxu0 0.0
    %153 = vmatprep.subr.mxu0 0.0
    %154 = vmatpush2.msra.mxu0 0.0
    %155 = vmatprep.subr.mxu0 0.0
    %156 = vmatpush2.msra.mxu0 0.0
    %157 = vmatprep.subr.mxu0 0.0
    %158 = vmatpush2.msra.mxu0 0.0
    %159 = vmatprep.subr.mxu0 0.0
    %160 = vmatpush2.msra.mxu0 0.0
    %161 = vmatprep.subr.mxu0 0.0
    %162 = vmatpush2.msra.mxu0 0.0
    %163 = vmatprep.subr.mxu0 0.0
    %164 = vmatpush2.msra.mxu0 0.0
    %165 = vmatprep.subr.mxu0 0.0
    %166 = vmatpush2.msra.mxu0 0.0
    %167 = vmatprep.mubr.f32.mxu0 0.0
    %168 = vmatmul.mubr.f32.gmra.mxu0 %v101
    %v169 = vpop.f32.mrf.mxu0
    %v170 = vadd.f32 %v98, %v169
    %v171 = vpop.f32.mrf.mxu0
    %172 = vdwg.mxu0
    %173 = vadd.xlane.f32.xlu0 %v170
    %v174 = vpop.xlane.xlu0 %173
    %v175 = vmul.f32 %v174, 0.03125
    %v176 = vsub.f32 %v170, %v175
    %v177 = vmul.f32 %v176, %v176
    %178 = vadd.xlane.f32.xlu0 %v177
    %v179 = vpop.xlane.xlu0 %178
    %v180 = vmul.f32 %v175, %v175
    %v181 = vmul.f32 %v180, 96.0
    %v182 = vsub.f32 %v179, %v181
    %v183 = vmul.f32 %v182, 0.03125
    %v184 = vadd.f32 %v183, 1e-05
    %v185 = vrsqrt.pop %v184
    %v186 = vmul.f32 %v176, %v185
    %v187 = vlaneseq
    %v188 = vshrl.u32 %v187, 7
    %v189 = vsub.s32 0, %v188
    %v190 = vrot.slane %v86, %v189
    %v191 = vmul.f32 %v186, %v190
    %v192 = vlaneseq
    %v193 = vshrl.u32 %v192, 7
    %v194 = vsub.s32 0, %v193
    %v195 = vrot.slane %v87, %v194
    %v196 = vadd.f32 %v191, %v195
    %vm197 = vcmp.ge.f32.partialorder %v196, 0.0
    %v198 = vmul.f32 %v196, 0.01
    %v199 = vsel %vm197, %v196, %v198
    %v200 = vld [vmem:[#allocation7] sm:$0xff]
    %v201 = vld [vmem:[#allocation7 + $0x8] sm:$0xff]
    %v202 = vld [vmem:[#allocation7 + $0x10] sm:$0xff]
    %v203 = vld [vmem:[#allocation7 + $0x18] sm:$0xff]
    %v204 = vld [vmem:[#allocation7 + $0x20] sm:$0xff]
    %v205 = vld [vmem:[#allocation7 + $0x28] sm:$0xff]
    %v206 = vld [vmem:[#allocation7 + $0x30] sm:$0xff]
    %v207 = vld [vmem:[#allocation7 + $0x38] sm:$0xff]
    %v208 = vld [vmem:[#allocation7 + $0x40] sm:$0xff]
    %v209 = vld [vmem:[#allocation7 + $0x48] sm:$0xff]
    %v210 = vld [vmem:[#allocation7 + $0x50] sm:$0xff]
    %v211 = vld [vmem:[#allocation7 + $0x58] sm:$0xff]
    %v212 = vld [vmem:[#allocation7 + $0x60] sm:$0xff]
    %v213 = vld [vmem:[#allocation7 + $0x68] sm:$0xff]
    %v214 = vld [vmem:[#allocation7 + $0x70] sm:$0xff]
    %v215 = vld [vmem:[#allocation7 + $0x78] sm:$0xff]
    %v216 = vlaneseq
    %v217 = vshrl.u32 %v216, 7
    %v218 = vsub.s32 0, %v217
    %v219 = vrot.slane %v88, %v218
    %220 = vmatprep.subr.mxu0 0.0
    %221 = vmatpush1.msra.mxu0 %v215
    %222 = vmatprep.subr.mxu0 0.0
    %223 = vmatpush1.msra.mxu0 %v214
    %224 = vmatprep.subr.mxu0 0.0
    %225 = vmatpush1.msra.mxu0 %v213
    %226 = vmatprep.subr.mxu0 0.0
    %227 = vmatpush1.msra.mxu0 %v212
    %228 = vmatprep.subr.mxu0 0.0
    %229 = vmatpush1.msra.mxu0 %v211
    %230 = vmatprep.subr.mxu0 0.0
    %231 = vmatpush1.msra.mxu0 %v210
    %232 = vmatprep.subr.mxu0 0.0
    %233 = vmatpush1.msra.mxu0 %v209
    %234 = vmatprep.subr.mxu0 0.0
    %235 = vmatpush1.msra.mxu0 %v208
    %236 = vmatprep.subr.mxu0 0.0
    %237 = vmatpush1.msra.mxu0 %v207
    %238 = vmatprep.subr.mxu0 0.0
    %239 = vmatpush1.msra.mxu0 %v206
    %240 = vmatprep.subr.mxu0 0.0
    %241 = vmatpush1.msra.mxu0 %v205
    %242 = vmatprep.subr.mxu0 0.0
    %243 = vmatpush1.msra.mxu0 %v204
    %244 = vmatprep.subr.mxu0 0.0
    %245 = vmatpush1.msra.mxu0 %v203
    %246 = vmatprep.subr.mxu0 0.0
    %247 = vmatpush1.msra.mxu0 %v202
    %248 = vmatprep.subr.mxu0 0.0
    %249 = vmatpush1.msra.mxu0 %v201
    %250 = vmatprep.subr.mxu0 0.0
    %251 = vmatpush1.msra.mxu0 %v200
    %252 = vmatprep.subr.mxu0 0.0
    %253 = vmatpush2.msra.mxu0 0.0
    %254 = vmatprep.subr.mxu0 0.0
    %255 = vmatpush2.msra.mxu0 0.0
    %256 = vmatprep.subr.mxu0 0.0
    %257 = vmatpush2.msra.mxu0 0.0
    %258 = vmatprep.subr.mxu0 0.0
    %259 = vmatpush2.msra.mxu0 0.0
    %260 = vmatprep.subr.mxu0 0.0
    %261 = vmatpush2.msra.mxu0 0.0
    %262 = vmatprep.subr.mxu0 0.0
    %263 = vmatpush2.msra.mxu0 0.0
    %264 = vmatprep.subr.mxu0 0.0
    %265 = vmatpush2.msra.mxu0 0.0
    %266 = vmatprep.subr.mxu0 0.0
    %267 = vmatpush2.msra.mxu0 0.0
    %268 = vmatprep.subr.mxu0 0.0
    %269 = vmatpush2.msra.mxu0 0.0
    %270 = vmatprep.subr.mxu0 0.0
    %271 = vmatpush2.msra.mxu0 0.0
    %272 = vmatprep.subr.mxu0 0.0
    %273 = vmatpush2.msra.mxu0 0.0
    %274 = vmatprep.subr.mxu0 0.0
    %275 = vmatpush2.msra.mxu0 0.0
    %276 = vmatprep.subr.mxu0 0.0
    %277 = vmatpush2.msra.mxu0 0.0
    %278 = vmatprep.subr.mxu0 0.0
    %279 = vmatpush2.msra.mxu0 0.0
    %280 = vmatprep.subr.mxu0 0.0
    %281 = vmatpush2.msra.mxu0 0.0
    %282 = vmatprep.subr.mxu0 0.0
    %283 = vmatpush2.msra.mxu0 0.0
    %284 = vmatprep.mubr.f32.mxu0 0.0
    %285 = vmatmul.mubr.f32.gmra.mxu0 %v199
    %v286 = vpop.f32.mrf.mxu0
    %v287 = vadd.f32 %v219, %v286
    %v288 = vpop.f32.mrf.mxu0
    %289 = vdwg.mxu0
    %290 = vadd.xlane.f32.xlu0 %v287
    %v291 = vpop.xlane.xlu0 %290
    %v292 = vmul.f32 %v291, 0.03125
    %v293 = vsub.f32 %v287, %v292
    %v294 = vmul.f32 %v293, %v293
    %295 = vadd.xlane.f32.xlu0 %v294
    %v296 = vpop.xlane.xlu0 %295
    %v297 = vmul.f32 %v292, %v292
    %v298 = vmul.f32 %v297, 96.0
    %v299 = vsub.f32 %v296, %v298
    %v300 = vmul.f32 %v299, 0.03125
    %v301 = vadd.f32 %v300, 1e-05
    %v302 = vrsqrt.pop %v301
    %v303 = vmul.f32 %v293, %v302
    %v304 = vlaneseq
    %v305 = vshrl.u32 %v304, 7
    %v306 = vsub.s32 0, %v305
    %v307 = vrot.slane %v89, %v306
    %v308 = vmul.f32 %v303, %v307
    %v309 = vlaneseq
    %v310 = vshrl.u32 %v309, 7
    %v311 = vsub.s32 0, %v310
    %v312 = vrot.slane %v90, %v311
    %v313 = vadd.f32 %v308, %v312
    %vm314 = vcmp.ge.f32.partialorder %v313, 0.0
    %v315 = vmul.f32 %v313, 0.01
    %v316 = vsel %vm314, %v313, %v315
    %v317 = vld [vmem:[#allocation8] sm:$0xff]
    %v318 = vld [vmem:[#allocation8 + $0x8] sm:$0xff]
    %v319 = vld [vmem:[#allocation8 + $0x10] sm:$0xff]
    %v320 = vld [vmem:[#allocation8 + $0x18] sm:$0xff]
    %v321 = vld [vmem:[#allocation8 + $0x20] sm:$0xff]
    %v322 = vld [vmem:[#allocation8 + $0x28] sm:$0xff]
    %v323 = vld [vmem:[#allocation8 + $0x30] sm:$0xff]
    %v324 = vld [vmem:[#allocation8 + $0x38] sm:$0xff]
    %v325 = vld [vmem:[#allocation8 + $0x40] sm:$0xff]
    %v326 = vld [vmem:[#allocation8 + $0x48] sm:$0xff]
    %v327 = vld [vmem:[#allocation8 + $0x50] sm:$0xff]
    %v328 = vld [vmem:[#allocation8 + $0x58] sm:$0xff]
    %v329 = vld [vmem:[#allocation8 + $0x60] sm:$0xff]
    %v330 = vld [vmem:[#allocation8 + $0x68] sm:$0xff]
    %v331 = vld [vmem:[#allocation8 + $0x70] sm:$0xff]
    %v332 = vld [vmem:[#allocation8 + $0x78] sm:$0xff]
    %v333 = vlaneseq
    %v334 = vshrl.u32 %v333, 7
    %v335 = vsub.s32 0, %v334
    %v336 = vrot.slane %v91, %v335
    %337 = vmatprep.subr.mxu0 0.0
    %338 = vmatpush1.msra.mxu0 %v332
    %339 = vmatprep.subr.mxu0 0.0
    %340 = vmatpush1.msra.mxu0 %v331
    %341 = vmatprep.subr.mxu0 0.0
    %342 = vmatpush1.msra.mxu0 %v330
    %343 = vmatprep.subr.mxu0 0.0
    %344 = vmatpush1.msra.mxu0 %v329
    %345 = vmatprep.subr.mxu0 0.0
    %346 = vmatpush1.msra.mxu0 %v328
    %347 = vmatprep.subr.mxu0 0.0
    %348 = vmatpush1.msra.mxu0 %v327
    %349 = vmatprep.subr.mxu0 0.0
    %350 = vmatpush1.msra.mxu0 %v326
    %351 = vmatprep.subr.mxu0 0.0
    %352 = vmatpush1.msra.mxu0 %v325
    %353 = vmatprep.subr.mxu0 0.0
    %354 = vmatpush1.msra.mxu0 %v324
    %355 = vmatprep.subr.mxu0 0.0
    %356 = vmatpush1.msra.mxu0 %v323
    %357 = vmatprep.subr.mxu0 0.0
    %358 = vmatpush1.msra.mxu0 %v322
    %359 = vmatprep.subr.mxu0 0.0
    %360 = vmatpush1.msra.mxu0 %v321
    %361 = vmatprep.subr.mxu0 0.0
    %362 = vmatpush1.msra.mxu0 %v320
    %363 = vmatprep.subr.mxu0 0.0
    %364 = vmatpush1.msra.mxu0 %v319
    %365 = vmatprep.subr.mxu0 0.0
    %366 = vmatpush1.msra.mxu0 %v318
    %367 = vmatprep.subr.mxu0 0.0
    %368 = vmatpush1.msra.mxu0 %v317
    %369 = vmatprep.subr.mxu0 0.0
    %370 = vmatpush2.msra.mxu0 0.0
    %371 = vmatprep.subr.mxu0 0.0
    %372 = vmatpush2.msra.mxu0 0.0
    %373 = vmatprep.subr.mxu0 0.0
    %374 = vmatpush2.msra.mxu0 0.0
    %375 = vmatprep.subr.mxu0 0.0
    %376 = vmatpush2.msra.mxu0 0.0
    %377 = vmatprep.subr.mxu0 0.0
    %378 = vmatpush2.msra.mxu0 0.0
    %379 = vmatprep.subr.mxu0 0.0
    %380 = vmatpush2.msra.mxu0 0.0
    %381 = vmatprep.subr.mxu0 0.0
    %382 = vmatpush2.msra.mxu0 0.0
    %383 = vmatprep.subr.mxu0 0.0
    %384 = vmatpush2.msra.mxu0 0.0
    %385 = vmatprep.subr.mxu0 0.0
    %386 = vmatpush2.msra.mxu0 0.0
    %387 = vmatprep.subr.mxu0 0.0
    %388 = vmatpush2.msra.mxu0 0.0
    %389 = vmatprep.subr.mxu0 0.0
    %390 = vmatpush2.msra.mxu0 0.0
    %391 = vmatprep.subr.mxu0 0.0
    %392 = vmatpush2.msra.mxu0 0.0
    %393 = vmatprep.subr.mxu0 0.0
    %394 = vmatpush2.msra.mxu0 0.0
    %395 = vmatprep.subr.mxu0 0.0
    %396 = vmatpush2.msra.mxu0 0.0
    %397 = vmatprep.subr.mxu0 0.0
    %398 = vmatpush2.msra.mxu0 0.0
    %399 = vmatprep.subr.mxu0 0.0
    %400 = vmatpush2.msra.mxu0 0.0
    %401 = vmatprep.mubr.f32.mxu0 0.0
    %402 = vmatmul.mubr.f32.gmra.mxu0 %v316
    %v403 = vpop.f32.mrf.mxu0
    %v404 = vadd.f32 %v336, %v403
    %v405 = vpop.f32.mrf.mxu0
    %406 = vdwg.mxu0
    %407 = vmax.xlane.f32.xlu0 %v404
    %v408 = vpop.xlane.xlu0 %407
    %v409 = vsub.f32 %v404, %v408
    %v410 = vmul.f32 %v409, 1.442695
    %v411 = vpow.pop %v410
    %412 = vadd.xlane.f32.xlu0 %v411
    %v413 = vpop.xlane.xlu0 %412
    %v414 = vrcp.pop %v413
    %v415 = vmul.f32 %v413, %v414
    %v416 = vsub.f32 2.0, %v415
    %v417 = vmul.f32 %v414, %v416
    %v418 = vmul.f32 %v411, %v417
    %419 = vst [vmem:[#allocation11] sm:$0xff] %v418
    // Predicated region
    $region42: #{tpu_custom_call.1} parent=1 // pred_check
      _
    $region43: #{tpu_custom_call.1} parent=1 // pred_check_branch
      %421 = sbr.rel (0) target = $region45
    $region44: #{tpu_custom_call.1} parent=1 // pred_region
      %s423 = ssub.s32 128, 128
      %424 = vsyncadd [#allocation4], %s423
      %s426 = sshll.u32 [#allocation11], 4
      %s427 = int_to_ptr.vmem [resolvable:$true] %s426
      %429 = dma.vmem_to_hbm [thread:$0]  %s427, 128, %s5, [#allocation4]
    $region45: #{tpu_custom_call.1} parent=1 // pred_fallthru
      _
    // Predicated region
    $region46: #{tpu_custom_call.1} parent=1 // pred_check
      _
    $region47: #{tpu_custom_call.1} parent=1 // pred_check_branch
      %431 = sbr.rel (0) target = $region49
    $region48: #{tpu_custom_call.1} parent=1 // pred_region
      %432 = dma.done [#allocation4], 128
    $region49: #{tpu_custom_call.1} parent=1 // pred_fallthru
      _
    %433 = vsyncpa [#allocation3], 1
    %434 = vsyncpa [#allocation6], 1
    %435 = vsyncpa [#allocation9], 1
    %436 = vsyncpa [#allocation4], 1

// kernel: tpu_custom_call.1
$region0: #{tpu_custom_call.1}
  #allocation0 [shape = 'u32[]', space=smem, size = 0x4, offset = 0x4, fixed_abs, tag = 'smem constant byte address 0x4 - core index']
  #allocation1 [shape = 'u32[144,128]{1,0:T(1,128)}', space=vmem, size = 0x12000, scoped, tag = 'internal scratch']
  %s0 = inlined_call_operand.hbm [shape: f32[8,16], index: 0, kind: input, shape index: {}]
  %s1 = inlined_call_operand.hbm [shape: f32[16,128], index: 1, kind: input, shape index: {}]
  %s2 = inlined_call_operand.hbm [shape: f32[128,128], index: 2, kind: input, shape index: {}]
  %s3 = inlined_call_operand.hbm [shape: f32[128,128], index: 3, kind: input, shape index: {}]
  %s4 = inlined_call_operand.hbm [shape: f32[8,128], index: 4, kind: input, shape index: {}]
  %s5 = inlined_call_operand.hbm [shape: f32[8,128], index: 5, kind: output, shape index: {}]
  %s6 = sld [smem:[#allocation0]]
  $region50: #{tpu_custom_call.1} parent=0
    _
  %s8 = ssub.s32 1, %s6
  %s9 = scalar_select 0, %s8, %s6
  $region1: #{tpu_custom_call.1} parent=0
    #allocation2 [shape = 'u8[4096]{0}', space=vmem, size = 0x1000, scoped, tag = 'input window, operand 0, single buffered']
    #allocation3 [shape = 's32[1]{0}', space=sflag, size = 0x4, scoped, tag = 'scoped memory for tpu_custom_call.1']
    #allocation4 [shape = 's32[1]{0}', space=sflag, size = 0x4, scoped, tag = 'scoped memory for tpu_custom_call.1']
    #allocation5 [shape = 'u8[8192]{0}', space=vmem, size = 0x2000, scoped, tag = 'input window, operand 1, single buffered']
    #allocation6 [shape = 's32[1]{0}', space=sflag, size = 0x4, scoped, tag = 'scoped memory for tpu_custom_call.1']
    #allocation7 [shape = 'u8[65536]{0}', space=vmem, size = 0x10000, scoped, tag = 'input window, operand 2, single buffered']
    #allocation8 [shape = 'u8[65536]{0}', space=vmem, size = 0x10000, scoped, tag = 'input window, operand 3, single buffered']
    #allocation9 [shape = 's32[1]{0}', space=sflag, size = 0x4, scoped, tag = 'scoped memory for tpu_custom_call.1']
    #allocation10 [shape = 'u8[4096]{0}', space=vmem, size = 0x1000, scoped, tag = 'input window, operand 4, single buffered']
    #allocation11 [shape = 'u8[4096]{0}', space=vmem, size = 0x1000, scoped, tag = 'output window, operand 0, single buffered']
    %10 = vsyncpa [#allocation3], 0
    %11 = vsyncpa [#allocation6], 0
    %12 = vsyncpa [#allocation9], 0
    %13 = vsyncpa [#allocation4], 0
    // Predicated region
    $region2: #{tpu_custom_call.1} parent=1 // pred_check
      _
    $region3: #{tpu_custom_call.1} parent=1 // pred_check_branch
      %15 = sbr.rel (0) target = $region5
    $region4: #{tpu_custom_call.1} parent=1 // pred_region
      %s17 = ssub.s32 128, 128
      %18 = vsyncadd [#allocation3], %s17
      %s20 = sshll.u32 [#allocation2], 4
      %s21 = int_to_ptr.vmem [resolvable:$true] %s20
      %23 = dma.hbm_to_vmem [thread:$0]  %s0, 128, %s21, [#allocation3]
    $region5: #{tpu_custom_call.1} parent=1 // pred_fallthru
      _
    // Predicated region
    $region6: #{tpu_custom_call.1} parent=1 // pred_check
      _
    $region7: #{tpu_custom_call.1} parent=1 // pred_check_branch
      %25 = sbr.rel (0) target = $region9
    $region8: #{tpu_custom_call.1} parent=1 // pred_region
      %s27 = ssub.s32 256, 256
      %28 = vsyncadd [#allocation6], %s27
      %s29 = sshll.u32 [#allocation5], 4
      %s30 = int_to_ptr.vmem [resolvable:$true] %s29
      %35 = dma.hbm_to_vmem [thread:$0]  %s1, 256, %s30, [#allocation6], 128, 128, 8
    $region9: #{tpu_custom_call.1} parent=1 // pred_fallthru
      _
    // Predicated region
    $region10: #{tpu_custom_call.1} parent=1 // pred_check
      _
    $region11: #{tpu_custom_call.1} parent=1 // pred_check_branch
      %37 = sbr.rel (0) target = $region13
    $region12: #{tpu_custom_call.1} parent=1 // pred_region
      %s39 = ssub.s32 2048, 2048
      %40 = vsyncadd [#allocation6], %s39
      %s41 = sshll.u32 [#allocation7], 4
      %s42 = int_to_ptr.vmem [resolvable:$true] %s41
      %47 = dma.hbm_to_vmem [thread:$0]  %s2, 2048, %s42, [#allocation6], 128, 128, 8
    $region13: #{tpu_custom_call.1} parent=1 // pred_fallthru
      _
    // Predicated region
    $region14: #{tpu_custom_call.1} parent=1 // pred_check
      _
    $region15: #{tpu_custom_call.1} parent=1 // pred_check_branch
      %49 = sbr.rel (0) target = $region17
    $region16: #{tpu_custom_call.1} parent=1 // pred_region
      %s51 = ssub.s32 2048, 2048
      %52 = vsyncadd [#allocation9], %s51
      %s53 = sshll.u32 [#allocation8], 4
      %s54 = int_to_ptr.vmem [resolvable:$true] %s53
      %59 = dma.hbm_to_vmem [thread:$0]  %s3, 2048, %s54, [#allocation9], 128, 128, 8
    $region17: #{tpu_custom_call.1} parent=1 // pred_fallthru
      _
    // Predicated region
    $region18: #{tpu_custom_call.1} parent=1 // pred_check
      _
    $region19: #{tpu_custom_call.1} parent=1 // pred_check_branch
      %61 = sbr.rel (0) target = $region21
    $region20: #{tpu_custom_call.1} parent=1 // pred_region
      %s63 = ssub.s32 128, 128
      %64 = vsyncadd [#allocation9], %s63
      %s66 = sshll.u32 [#allocation10], 4
      %s67 = int_to_ptr.vmem [resolvable:$true] %s66
      %69 = dma.hbm_to_vmem [thread:$0]  %s4, 128, %s67, [#allocation9]
    $region21: #{tpu_custom_call.1} parent=1 // pred_fallthru
      _
    // Predicated region
    $region22: #{tpu_custom_call.1} parent=1 // pred_check
      _
    $region23: #{tpu_custom_call.1} parent=1 // pred_check_branch
      %71 = sbr.rel (0) target = $region25
    $region24: #{tpu_custom_call.1} parent=1 // pred_region
      %72 = dma.done [#allocation3], 128
    $region25: #{tpu_custom_call.1} parent=1 // pred_fallthru
      _
    // Predicated region
    $region26: #{tpu_custom_call.1} parent=1 // pred_check
      _
    $region27: #{tpu_custom_call.1} parent=1 // pred_check_branch
      %74 = sbr.rel (0) target = $region29
    $region28: #{tpu_custom_call.1} parent=1 // pred_region
      %75 = dma.done [#allocation6], 256
    $region29: #{tpu_custom_call.1} parent=1 // pred_fallthru
      _
    // Predicated region
    $region30: #{tpu_custom_call.1} parent=1 // pred_check
      _
    $region31: #{tpu_custom_call.1} parent=1 // pred_check_branch
      %77 = sbr.rel (0) target = $region33
    $region32: #{tpu_custom_call.1} parent=1 // pred_region
      %78 = dma.done [#allocation6], 2048
    $region33: #{tpu_custom_call.1} parent=1 // pred_fallthru
      _
    // Predicated region
    $region34: #{tpu_custom_call.1} parent=1 // pred_check
      _
    $region35: #{tpu_custom_call.1} parent=1 // pred_check_branch
      %80 = sbr.rel (0) target = $region37
    $region36: #{tpu_custom_call.1} parent=1 // pred_region
      %81 = dma.done [#allocation9], 2048
    $region37: #{tpu_custom_call.1} parent=1 // pred_fallthru
      _
    // Predicated region
    $region38: #{tpu_custom_call.1} parent=1 // pred_check
      _
    $region39: #{tpu_custom_call.1} parent=1 // pred_check_branch
      %83 = sbr.rel (0) target = $region41
    $region40: #{tpu_custom_call.1} parent=1 // pred_region
      %84 = dma.done [#allocation9], 128
    $region41: #{tpu_custom_call.1} parent=1 // pred_fallthru
      _
    %v85 = vld [vmem:[#allocation10] sm:$0x1]
    %v86 = vld [vmem:[#allocation10 + $0x1] sm:$0x1]
    %v87 = vld [vmem:[#allocation10 + $0x2] sm:$0x1]
    %v88 = vld [vmem:[#allocation10 + $0x3] sm:$0x1]
    %v89 = vld [vmem:[#allocation10 + $0x4] sm:$0x1]
    %v90 = vld [vmem:[#allocation10 + $0x5] sm:$0x1]
    %v91 = vld [vmem:[#allocation10 + $0x6] sm:$0x1]
    %v92 = vld [vmem:[#allocation2] sm:$0xff]
    %v93 = vld [vmem:[#allocation5] sm:$0xff]
    %v94 = vld [vmem:[#allocation5 + $0x8] sm:$0xff]
    %v95 = vlaneseq
    %v96 = vshrl.u32 %v95, 7
    %v97 = vsub.s32 0, %v96
    %v98 = vrot.slane %v85, %v97
    %vm99 = vcmask 130048
    %v101 = vsel %vm99, %v92, 0
    %103 = vmatprep.subr.mxu0 0.0
    %104 = vmatpush1.msra.mxu0 0.0
    %105 = vmatprep.subr.mxu0 0.0
    %106 = vmatpush1.msra.mxu0 0.0
    %107 = vmatprep.subr.mxu0 0.0
    %108 = vmatpush1.msra.mxu0 0.0
    %109 = vmatprep.subr.mxu0 0.0
    %110 = vmatpush1.msra.mxu0 0.0
    %111 = vmatprep.subr.mxu0 0.0
    %112 = vmatpush1.msra.mxu0 0.0
    %113 = vmatprep.subr.mxu0 0.0
    %114 = vmatpush1.msra.mxu0 0.0
    %115 = vmatprep.subr.mxu0 0.0
    %116 = vmatpush1.msra.mxu0 0.0
    %117 = vmatprep.subr.mxu0 0.0
    %118 = vmatpush1.msra.mxu0 0.0
    %119 = vmatprep.subr.mxu0 0.0
    %120 = vmatpush1.msra.mxu0 0.0
    %121 = vmatprep.subr.mxu0 0.0
    %122 = vmatpush1.msra.mxu0 0.0
    %123 = vmatprep.subr.mxu0 0.0
    %124 = vmatpush1.msra.mxu0 0.0
    %125 = vmatprep.subr.mxu0 0.0
    %126 = vmatpush1.msra.mxu0 0.0
    %127 = vmatprep.subr.mxu0 0.0
    %128 = vmatpush1.msra.mxu0 0.0
    %129 = vmatprep.subr.mxu0 0.0
    %130 = vmatpush1.msra.mxu0 0.0
    %131 = vmatprep.subr.mxu0 0.0
    %132 = vmatpush1.msra.mxu0 %v94
    %133 = vmatprep.subr.mxu0 0.0
    %134 = vmatpush1.msra.mxu0 %v93
    %135 = vmatprep.subr.mxu0 0.0
    %136 = vmatpush2.msra.mxu0 0.0
    %137 = vmatprep.subr.mxu0 0.0
    %138 = vmatpush2.msra.mxu0 0.0
    %139 = vmatprep.subr.mxu0 0.0
    %140 = vmatpush2.msra.mxu0 0.0
    %141 = vmatprep.subr.mxu0 0.0
    %142 = vmatpush2.msra.mxu0 0.0
    %143 = vmatprep.subr.mxu0 0.0
    %144 = vmatpush2.msra.mxu0 0.0
    %145 = vmatprep.subr.mxu0 0.0
    %146 = vmatpush2.msra.mxu0 0.0
    %147 = vmatprep.subr.mxu0 0.0
    %148 = vmatpush2.msra.mxu0 0.0
    %149 = vmatprep.subr.mxu0 0.0
    %150 = vmatpush2.msra.mxu0 0.0
    %151 = vmatprep.subr.mxu0 0.0
    %152 = vmatpush2.msra.mxu0 0.0
    %153 = vmatprep.subr.mxu0 0.0
    %154 = vmatpush2.msra.mxu0 0.0
    %155 = vmatprep.subr.mxu0 0.0
    %156 = vmatpush2.msra.mxu0 0.0
    %157 = vmatprep.subr.mxu0 0.0
    %158 = vmatpush2.msra.mxu0 0.0
    %159 = vmatprep.subr.mxu0 0.0
    %160 = vmatpush2.msra.mxu0 0.0
    %161 = vmatprep.subr.mxu0 0.0
    %162 = vmatpush2.msra.mxu0 0.0
    %163 = vmatprep.subr.mxu0 0.0
    %164 = vmatpush2.msra.mxu0 0.0
    %165 = vmatprep.subr.mxu0 0.0
    %166 = vmatpush2.msra.mxu0 0.0
    %167 = vmatprep.mubr.f32.mxu0 0.0
    %168 = vmatmul.mubr.f32.gmra.mxu0 %v101
    %v169 = vpop.f32.mrf.mxu0
    %v170 = vadd.f32 %v98, %v169
    %v171 = vpop.f32.mrf.mxu0
    %172 = vdwg.mxu0
    %173 = vadd.xlane.f32.xlu0 %v170
    %v174 = vpop.xlane.xlu0 %173
    %v175 = vmul.f32 %v174, 0.03125
    %v176 = vsub.f32 %v170, %v175
    %v177 = vmul.f32 %v176, %v176
    %178 = vadd.xlane.f32.xlu0 %v177
    %v179 = vpop.xlane.xlu0 %178
    %v180 = vmul.f32 %v175, %v175
    %v181 = vmul.f32 %v180, 96.0
    %v182 = vsub.f32 %v179, %v181
    %v183 = vmul.f32 %v182, 0.03125
    %v184 = vadd.f32 %v183, 1e-05
    %v185 = vrsqrt.pop %v184
    %v186 = vmul.f32 %v176, %v185
    %v187 = vlaneseq
    %v188 = vshrl.u32 %v187, 7
    %v189 = vsub.s32 0, %v188
    %v190 = vrot.slane %v86, %v189
    %v191 = vmul.f32 %v186, %v190
    %v192 = vlaneseq
    %v193 = vshrl.u32 %v192, 7
    %v194 = vsub.s32 0, %v193
    %v195 = vrot.slane %v87, %v194
    %v196 = vadd.f32 %v191, %v195
    %vm197 = vcmp.ge.f32.partialorder %v196, 0.0
    %v198 = vmul.f32 %v196, 0.01
    %v199 = vsel %vm197, %v196, %v198
    %v200 = vld [vmem:[#allocation7] sm:$0xff]
    %v201 = vld [vmem:[#allocation7 + $0x8] sm:$0xff]
    %v202 = vld [vmem:[#allocation7 + $0x10] sm:$0xff]
    %v203 = vld [vmem:[#allocation7 + $0x18] sm:$0xff]
    %v204 = vld [vmem:[#allocation7 + $0x20] sm:$0xff]
    %v205 = vld [vmem:[#allocation7 + $0x28] sm:$0xff]
    %v206 = vld [vmem:[#allocation7 + $0x30] sm:$0xff]
    %v207 = vld [vmem:[#allocation7 + $0x38] sm:$0xff]
    %v208 = vld [vmem:[#allocation7 + $0x40] sm:$0xff]
    %v209 = vld [vmem:[#allocation7 + $0x48] sm:$0xff]
    %v210 = vld [vmem:[#allocation7 + $0x50] sm:$0xff]
    %v211 = vld [vmem:[#allocation7 + $0x58] sm:$0xff]
    %v212 = vld [vmem:[#allocation7 + $0x60] sm:$0xff]
    %v213 = vld [vmem:[#allocation7 + $0x68] sm:$0xff]
    %v214 = vld [vmem:[#allocation7 + $0x70] sm:$0xff]
    %v215 = vld [vmem:[#allocation7 + $0x78] sm:$0xff]
    %v216 = vlaneseq
    %v217 = vshrl.u32 %v216, 7
    %v218 = vsub.s32 0, %v217
    %v219 = vrot.slane %v88, %v218
    %220 = vmatprep.subr.mxu0 0.0
    %221 = vmatpush1.msra.mxu0 %v215
    %222 = vmatprep.subr.mxu0 0.0
    %223 = vmatpush1.msra.mxu0 %v214
    %224 = vmatprep.subr.mxu0 0.0
    %225 = vmatpush1.msra.mxu0 %v213
    %226 = vmatprep.subr.mxu0 0.0
    %227 = vmatpush1.msra.mxu0 %v212
    %228 = vmatprep.subr.mxu0 0.0
    %229 = vmatpush1.msra.mxu0 %v211
    %230 = vmatprep.subr.mxu0 0.0
    %231 = vmatpush1.msra.mxu0 %v210
    %232 = vmatprep.subr.mxu0 0.0
    %233 = vmatpush1.msra.mxu0 %v209
    %234 = vmatprep.subr.mxu0 0.0
    %235 = vmatpush1.msra.mxu0 %v208
    %236 = vmatprep.subr.mxu0 0.0
    %237 = vmatpush1.msra.mxu0 %v207
    %238 = vmatprep.subr.mxu0 0.0
    %239 = vmatpush1.msra.mxu0 %v206
    %240 = vmatprep.subr.mxu0 0.0
    %241 = vmatpush1.msra.mxu0 %v205
    %242 = vmatprep.subr.mxu0 0.0
    %243 = vmatpush1.msra.mxu0 %v204
    %244 = vmatprep.subr.mxu0 0.0
    %245 = vmatpush1.msra.mxu0 %v203
    %246 = vmatprep.subr.mxu0 0.0
    %247 = vmatpush1.msra.mxu0 %v202
    %248 = vmatprep.subr.mxu0 0.0
    %249 = vmatpush1.msra.mxu0 %v201
    %250 = vmatprep.subr.mxu0 0.0
    %251 = vmatpush1.msra.mxu0 %v200
    %252 = vmatprep.subr.mxu0 0.0
    %253 = vmatpush2.msra.mxu0 0.0
    %254 = vmatprep.subr.mxu0 0.0
    %255 = vmatpush2.msra.mxu0 0.0
    %256 = vmatprep.subr.mxu0 0.0
    %257 = vmatpush2.msra.mxu0 0.0
    %258 = vmatprep.subr.mxu0 0.0
    %259 = vmatpush2.msra.mxu0 0.0
    %260 = vmatprep.subr.mxu0 0.0
    %261 = vmatpush2.msra.mxu0 0.0
    %262 = vmatprep.subr.mxu0 0.0
    %263 = vmatpush2.msra.mxu0 0.0
    %264 = vmatprep.subr.mxu0 0.0
    %265 = vmatpush2.msra.mxu0 0.0
    %266 = vmatprep.subr.mxu0 0.0
    %267 = vmatpush2.msra.mxu0 0.0
    %268 = vmatprep.subr.mxu0 0.0
    %269 = vmatpush2.msra.mxu0 0.0
    %270 = vmatprep.subr.mxu0 0.0
    %271 = vmatpush2.msra.mxu0 0.0
    %272 = vmatprep.subr.mxu0 0.0
    %273 = vmatpush2.msra.mxu0 0.0
    %274 = vmatprep.subr.mxu0 0.0
    %275 = vmatpush2.msra.mxu0 0.0
    %276 = vmatprep.subr.mxu0 0.0
    %277 = vmatpush2.msra.mxu0 0.0
    %278 = vmatprep.subr.mxu0 0.0
    %279 = vmatpush2.msra.mxu0 0.0
    %280 = vmatprep.subr.mxu0 0.0
    %281 = vmatpush2.msra.mxu0 0.0
    %282 = vmatprep.subr.mxu0 0.0
    %283 = vmatpush2.msra.mxu0 0.0
    %284 = vmatprep.mubr.f32.mxu0 0.0
    %285 = vmatmul.mubr.f32.gmra.mxu0 %v199
    %v286 = vpop.f32.mrf.mxu0
    %v287 = vadd.f32 %v219, %v286
    %v288 = vpop.f32.mrf.mxu0
    %289 = vdwg.mxu0
    %290 = vadd.xlane.f32.xlu0 %v287
    %v291 = vpop.xlane.xlu0 %290
    %v292 = vmul.f32 %v291, 0.03125
    %v293 = vsub.f32 %v287, %v292
    %v294 = vmul.f32 %v293, %v293
    %295 = vadd.xlane.f32.xlu0 %v294
    %v296 = vpop.xlane.xlu0 %295
    %v297 = vmul.f32 %v292, %v292
    %v298 = vmul.f32 %v297, 96.0
    %v299 = vsub.f32 %v296, %v298
    %v300 = vmul.f32 %v299, 0.03125
    %v301 = vadd.f32 %v300, 1e-05
    %v302 = vrsqrt.pop %v301
    %v303 = vmul.f32 %v293, %v302
    %v304 = vlaneseq
    %v305 = vshrl.u32 %v304, 7
    %v306 = vsub.s32 0, %v305
    %v307 = vrot.slane %v89, %v306
    %v308 = vmul.f32 %v303, %v307
    %v309 = vlaneseq
    %v310 = vshrl.u32 %v309, 7
    %v311 = vsub.s32 0, %v310
    %v312 = vrot.slane %v90, %v311
    %v313 = vadd.f32 %v308, %v312
    %vm314 = vcmp.ge.f32.partialorder %v313, 0.0
    %v315 = vmul.f32 %v313, 0.01
    %v316 = vsel %vm314, %v313, %v315
    %v317 = vld [vmem:[#allocation8] sm:$0xff]
    %v318 = vld [vmem:[#allocation8 + $0x8] sm:$0xff]
    %v319 = vld [vmem:[#allocation8 + $0x10] sm:$0xff]
    %v320 = vld [vmem:[#allocation8 + $0x18] sm:$0xff]
    %v321 = vld [vmem:[#allocation8 + $0x20] sm:$0xff]
    %v322 = vld [vmem:[#allocation8 + $0x28] sm:$0xff]
    %v323 = vld [vmem:[#allocation8 + $0x30] sm:$0xff]
    %v324 = vld [vmem:[#allocation8 + $0x38] sm:$0xff]
    %v325 = vld [vmem:[#allocation8 + $0x40] sm:$0xff]
    %v326 = vld [vmem:[#allocation8 + $0x48] sm:$0xff]
    %v327 = vld [vmem:[#allocation8 + $0x50] sm:$0xff]
    %v328 = vld [vmem:[#allocation8 + $0x58] sm:$0xff]
    %v329 = vld [vmem:[#allocation8 + $0x60] sm:$0xff]
    %v330 = vld [vmem:[#allocation8 + $0x68] sm:$0xff]
    %v331 = vld [vmem:[#allocation8 + $0x70] sm:$0xff]
    %v332 = vld [vmem:[#allocation8 + $0x78] sm:$0xff]
    %v333 = vlaneseq
    %v334 = vshrl.u32 %v333, 7
    %v335 = vsub.s32 0, %v334
    %v336 = vrot.slane %v91, %v335
    %337 = vmatprep.subr.mxu0 0.0
    %338 = vmatpush1.msra.mxu0 %v332
    %339 = vmatprep.subr.mxu0 0.0
    %340 = vmatpush1.msra.mxu0 %v331
    %341 = vmatprep.subr.mxu0 0.0
    %342 = vmatpush1.msra.mxu0 %v330
    %343 = vmatprep.subr.mxu0 0.0
    %344 = vmatpush1.msra.mxu0 %v329
    %345 = vmatprep.subr.mxu0 0.0
    %346 = vmatpush1.msra.mxu0 %v328
    %347 = vmatprep.subr.mxu0 0.0
    %348 = vmatpush1.msra.mxu0 %v327
    %349 = vmatprep.subr.mxu0 0.0
    %350 = vmatpush1.msra.mxu0 %v326
    %351 = vmatprep.subr.mxu0 0.0
    %352 = vmatpush1.msra.mxu0 %v325
    %353 = vmatprep.subr.mxu0 0.0
    %354 = vmatpush1.msra.mxu0 %v324
    %355 = vmatprep.subr.mxu0 0.0
    %356 = vmatpush1.msra.mxu0 %v323
    %357 = vmatprep.subr.mxu0 0.0
    %358 = vmatpush1.msra.mxu0 %v322
    %359 = vmatprep.subr.mxu0 0.0
    %360 = vmatpush1.msra.mxu0 %v321
    %361 = vmatprep.subr.mxu0 0.0
    %362 = vmatpush1.msra.mxu0 %v320
    %363 = vmatprep.subr.mxu0 0.0
    %364 = vmatpush1.msra.mxu0 %v319
    %365 = vmatprep.subr.mxu0 0.0
    %366 = vmatpush1.msra.mxu0 %v318
    %367 = vmatprep.subr.mxu0 0.0
    %368 = vmatpush1.msra.mxu0 %v317
    %369 = vmatprep.subr.mxu0 0.0
    %370 = vmatpush2.msra.mxu0 0.0
    %371 = vmatprep.subr.mxu0 0.0
    %372 = vmatpush2.msra.mxu0 0.0
    %373 = vmatprep.subr.mxu0 0.0
    %374 = vmatpush2.msra.mxu0 0.0
    %375 = vmatprep.subr.mxu0 0.0
    %376 = vmatpush2.msra.mxu0 0.0
    %377 = vmatprep.subr.mxu0 0.0
    %378 = vmatpush2.msra.mxu0 0.0
    %379 = vmatprep.subr.mxu0 0.0
    %380 = vmatpush2.msra.mxu0 0.0
    %381 = vmatprep.subr.mxu0 0.0
    %382 = vmatpush2.msra.mxu0 0.0
    %383 = vmatprep.subr.mxu0 0.0
    %384 = vmatpush2.msra.mxu0 0.0
    %385 = vmatprep.subr.mxu0 0.0
    %386 = vmatpush2.msra.mxu0 0.0
    %387 = vmatprep.subr.mxu0 0.0
    %388 = vmatpush2.msra.mxu0 0.0
    %389 = vmatprep.subr.mxu0 0.0
    %390 = vmatpush2.msra.mxu0 0.0
    %391 = vmatprep.subr.mxu0 0.0
    %392 = vmatpush2.msra.mxu0 0.0
    %393 = vmatprep.subr.mxu0 0.0
    %394 = vmatpush2.msra.mxu0 0.0
    %395 = vmatprep.subr.mxu0 0.0
    %396 = vmatpush2.msra.mxu0 0.0
    %397 = vmatprep.subr.mxu0 0.0
    %398 = vmatpush2.msra.mxu0 0.0
    %399 = vmatprep.subr.mxu0 0.0
    %400 = vmatpush2.msra.mxu0 0.0
    %401 = vmatprep.mubr.f32.mxu0 0.0
    %402 = vmatmul.mubr.f32.gmra.mxu0 %v316
    %v403 = vpop.f32.mrf.mxu0
    %v404 = vadd.f32 %v336, %v403
    %v405 = vpop.f32.mrf.mxu0
    %406 = vdwg.mxu0
    %407 = vmax.xlane.f32.xlu0 %v404
    %v408 = vpop.xlane.xlu0 %407
    %v409 = vsub.f32 %v404, %v408
    %v410 = vmul.f32 %v409, 1.442695
    %v411 = vpow.pop %v410
    %412 = vadd.xlane.f32.xlu0 %v411
    %v413 = vpop.xlane.xlu0 %412
    %v414 = vrcp.pop %v413
    %v415 = vmul.f32 %v413, %v414
    %v416 = vsub.f32 2.0, %v415
    %v417 = vmul.f32 %v414, %v416
    %v418 = vmul.f32 %v411, %v417
    %419 = vst [vmem:[#allocation11] sm:$0xff] %v418
    // Predicated region
    $region42: #{tpu_custom_call.1} parent=1 // pred_check
      _
    $region43: #{tpu_custom_call.1} parent=1 // pred_check_branch
      %421 = sbr.rel (0) target = $region45
    $region44: #{tpu_custom_call.1} parent=1 // pred_region
      %s423 = ssub.s32 128, 128
      %424 = vsyncadd [#allocation4], %s423
      %s426 = sshll.u32 [#allocation11], 4
      %s427 = int_to_ptr.vmem [resolvable:$true] %s426
      %429 = dma.vmem_to_hbm [thread:$0]  %s427, 128, %s5, [#allocation4]
    $region45: #{tpu_custom_call.1} parent=1 // pred_fallthru
      _
    // Predicated region
    $region46: #{tpu_custom_call.1} parent=1 // pred_check
      _
    $region47: #{tpu_custom_call.1} parent=1 // pred_check_branch
      %431 = sbr.rel (0) target = $region49
    $region48: #{tpu_custom_call.1} parent=1 // pred_region
      %432 = dma.done [#allocation4], 128
    $region49: #{tpu_custom_call.1} parent=1 // pred_fallthru
      _
    %433 = vsyncpa [#allocation3], 1
    %434 = vsyncpa [#allocation6], 1
    %435 = vsyncpa [#allocation9], 1
    %436 = vsyncpa [#allocation4], 1

</llo_original>
